<compile_context>
chip_gen: v7x
topology: tpu7x:2x2x1
jax: 0.10.0
libtpu: 0.0.40
codegen_flags: <defaults>
</compile_context>

<pallas_src>
import functools

import jax
import jax.numpy as jnp
from jax import lax
from jax.experimental import pallas as pl
from jax.experimental.pallas import tpu as pltpu


def _round_up(x, m):
    return ((x + m - 1) // m) * m


def _choose_blocks(n_total, dpad, vmem_budget=20 * 2**20):
    """D-, N- and VMEM-aware tile selection.

    * tr (anchor rows): the anchor tile is resident across the whole contrast
      sweep, so larger tr cuts the number of passes over the contrast stream;
      go larger when D is large (the HBM-bound regime on v6e), but keep >= 2
      row blocks so both v7x TensorCores get work, and stay in budget.
    * tc (contrast cols): as wide as the budget allows, to amortize the fixed
      per-grid-step overhead (dominant when D is small).
    """
    n8 = _round_up(max(n_total, 8), 8)
    n128 = _round_up(max(n_total, 128), 128)

    tr = 512 if dpad >= 1024 else 256
    # Keep the (double-buffered, bf16) anchor tile within half the budget.
    while tr > 64 and 2 * tr * dpad * 2 > vmem_budget // 2:
        tr //= 2
    if n8 >= 128:
        tr = min(tr, _round_up((n8 + 1) // 2, 8))   # >= 2 row blocks (v7x dual TC)
    tr = min(tr, n8)

    def vmem_use(tc_):
        # double-buffered bf16 input tiles + ~4 live (tr, tc) f32 temporaries
        return 2 * tr * dpad * 2 + 2 * tc_ * dpad * 2 + 4 * tr * tc_ * 4

    tc = 2048
    while tc > 128 and (tc > n128 or vmem_use(tc) > vmem_budget):
        tc //= 2
    return tr, max(tc, 128)


def _supcon_inter_kernel(ps_ref, pc_ref, qa_ref, kc_ref, out_ref,
                         m_ref, d_ref, *, n_real, tr, tc, has_col_pad):
    i = pl.program_id(0)            # anchor-row block   (parallel)
    j = pl.program_id(1)            # contrast-col block (reduction, last axis)
    last_j = pl.num_programs(1) - 1

    @pl.when(j == 0)
    def _init():
        m_ref[...] = jnp.full((tr, 1), -jnp.inf, jnp.float32)
        d_ref[...] = jnp.zeros((tr, 1), jnp.float32)

    # (tr, Dpad) bf16 @ (Dpad, tc) bf16 -> (tr, tc) f32 on the MXU.  The anchor
    # already carries the 1/temperature scale; the contrast is pre-transposed
    # in HBM so the RHS arrives in its natural (K, N) layout (no vxpose).
    s = jnp.dot(qa_ref[...], kc_ref[...], preferred_element_type=jnp.float32)

    def accumulate(s_eff):
        # Online (masked) log-sum-exp over the row: running max + exp-row-sum
        # on the XLU, exp on the EUP — the MXU stays free for the matmul.
        m_old = m_ref[...]
        m_new = jnp.maximum(m_old, jnp.max(s_eff, axis=1, keepdims=True))
        alpha = jnp.exp(m_old - m_new)
        p = jnp.exp(s_eff - m_new)
        d_ref[...] = alpha * d_ref[...] + jnp.sum(p, axis=1, keepdims=True)
        m_ref[...] = m_new

    row_lo = i * tr
    col_lo = j * tc
    # Mask work only on tiles that actually contain the diagonal (self
    # contrast) or padded columns; every other tile takes the fast path.
    touches_diag = jnp.logical_and(col_lo < row_lo + tr, row_lo < col_lo + tc)
    if has_col_pad:
        needs_mask = jnp.logical_or(touches_diag, j == last_j)
    else:
        needs_mask = touches_diag

    @pl.when(needs_mask)
    def _masked():
        row_ids = row_lo + lax.broadcasted_iota(jnp.int32, (tr, 1), 0)
        col_ids = col_lo + lax.broadcasted_iota(jnp.int32, (1, tc), 1)
        invalid = row_ids == col_ids                       # self-contrast
        if has_col_pad:
            invalid = jnp.logical_or(invalid, col_ids >= n_real)
        accumulate(jnp.where(invalid, jnp.float32(-jnp.inf), s))

    @pl.when(jnp.logical_not(needs_mask))
    def _fast():
        accumulate(s)

    @pl.when(j == last_j)
    def _finalize():
        # mean_log_prob_pos = pos_sum/cnt - logsumexp_{c != r}(raw logits);
        # the torch logits_max shift cancels algebraically.
        cnt = pc_ref[...]
        log_denom = m_ref[...] + jnp.log(d_ref[...])
        mlpp = (ps_ref[...] - cnt * log_denom) / jnp.maximum(cnt, jnp.float32(1.0))
        row_ids = row_lo + lax.broadcasted_iota(jnp.int32, (tr, 1), 0)
        # Anchors with zero positives are NaN in the torch module; valid SupCon
        # inputs always have >= 1 positive, so we emit 0 there instead.
        keep = jnp.logical_and(row_ids < n_real, cnt > jnp.float32(0.0))
        out_ref[...] = jnp.where(keep, -mlpp, jnp.float32(0.0))


def supcon_loss_inter(temperature, features, label1, label2,
                      block_rows=None, block_cols=None):
    """JAX/Pallas equivalent of SupConLoss_inter.forward (contrast_mode='all')."""
    if features.ndim < 3:
        raise ValueError("`features` needs to be [bsz, n_views, ...]")
    bsz, n_views = features.shape[0], features.shape[1]
    feats = features.reshape(bsz, n_views, -1).astype(jnp.float32)

    # contrast_feature = torch.cat(torch.unbind(features, dim=1), dim=0)
    cf = jnp.concatenate([feats[:, v, :] for v in range(n_views)], axis=0)
    n_total, d = cf.shape

    labels = jnp.concatenate(
        [label1.reshape(-1), label2.reshape(-1)], axis=0).astype(jnp.int32)
    # The torch module only makes sense when 2*bsz == n_views*bsz (n_views == 2).
    assert labels.shape[0] == n_total, "SupConLoss_inter requires n_views == 2"

    inv_t = jnp.float32(1.0) / jnp.asarray(temperature, jnp.float32)

    # ---- O(N*D) precompute of the positives (numerator) term ---------------
    # pos_sum[r] = sum_{c != r, label_c == label_r} <f_r, f_c> / T
    #            = ( <f_r, class_sum[label_r]> - <f_r, f_r> ) / T
    # pos_cnt[r] = |{c : label_c == label_r}| - 1
    _, lab_idx = jnp.unique(labels, size=n_total, return_inverse=True)
    lab_idx = lab_idx.reshape(-1)
    class_sum = jax.ops.segment_sum(cf, lab_idx, num_segments=n_total)
    class_cnt = jax.ops.segment_sum(
        jnp.ones((n_total,), jnp.float32), lab_idx, num_segments=n_total)
    pos_cnt = class_cnt[lab_idx] - 1.0
    pos_sum = inv_t * (jnp.sum(cf * class_sum[lab_idx], axis=1)
                       - jnp.sum(cf * cf, axis=1))

    dpad = _round_up(d, 128)
    tr_d, tc_d = _choose_blocks(n_total, dpad)
    tr = tr_d if block_rows is None else int(block_rows)
    tc = tc_d if block_cols is None else int(block_cols)
    assert tr % 8 == 0 and tc % 128 == 0, "block_rows % 8, block_cols % 128"

    # Rows and columns are padded independently (no lcm over-padding).
    npad_r = _round_up(n_total, tr)
    npad_c = _round_up(n_total, tc)

    # Fold 1/temperature into the bf16 anchor operand; zero-pad D to lane width.
    anchor = (jnp.pad(cf, ((0, npad_r - n_total), (0, dpad - d)))
              * inv_t).astype(jnp.bfloat16)                       # (Npad_r, Dpad)
    contrast_t = jnp.pad(cf, ((0, npad_c - n_total), (0, dpad - d))
                         ).astype(jnp.bfloat16).T                 # (Dpad, Npad_c)

    ps = jnp.pad(pos_sum, (0, npad_r - n_total)).reshape(npad_r, 1)
    pc = jnp.pad(pos_cnt, (0, npad_r - n_total)).reshape(npad_r, 1)

    kernel = functools.partial(_supcon_inter_kernel, n_real=n_total,
                               tr=tr, tc=tc, has_col_pad=npad_c > n_total)

    # Explicit VMEM limit: v5e's scoped default is only 16 MiB; keep the cap
    # comfortably below v7x's 64 MiB physical per-TensorCore.
    est = 2 * tr * dpad * 2 + 2 * tc * dpad * 2 + 6 * tr * tc * 4 + (2 << 20)
    vmem_limit = int(min(max(2 * est, 32 << 20), 56 << 20))

    per_row = pl.pallas_call(
        kernel,
        out_shape=jax.ShapeDtypeStruct((npad_r, 1), jnp.float32),
        grid_spec=pltpu.PrefetchScalarGridSpec(
            num_scalar_prefetch=0,
            grid=(npad_r // tr, npad_c // tc),
            in_specs=[
                pl.BlockSpec((tr, 1), lambda i, j: (i, 0)),       # pos_sum  (resident)
                pl.BlockSpec((tr, 1), lambda i, j: (i, 0)),       # pos_cnt  (resident)
                pl.BlockSpec((tr, dpad), lambda i, j: (i, 0)),    # anchor (scaled bf16)
                pl.BlockSpec((dpad, tc), lambda i, j: (0, j)),    # contrast^T (bf16)
            ],
            out_specs=pl.BlockSpec((tr, 1), lambda i, j: (i, 0)),
            scratch_shapes=[pltpu.VMEM((tr, 1), jnp.float32)] * 2,  # running max, exp-sum
        ),
        compiler_params=pltpu.CompilerParams(
            dimension_semantics=("parallel", "arbitrary"),
            vmem_limit_bytes=vmem_limit),
    )(ps, pc, anchor, contrast_t)

    # Padded / zero-positive rows were written as 0; mean over real anchors.
    return jnp.sum(per_row) / jnp.float32(n_total)


def _reference_loss(temperature, features, label1, label2):
    """Pure-JAX fp32 mirror of the PyTorch forward (HIGHEST-precision matmul)."""
    bsz, n_views = features.shape[0], features.shape[1]
    feats = features.reshape(bsz, n_views, -1).astype(jnp.float32)
    cf = jnp.concatenate([feats[:, v, :] for v in range(n_views)], axis=0)
    labels = jnp.concatenate([label1.reshape(-1), label2.reshape(-1)], 0)
    logits = jnp.dot(cf, cf.T, precision=lax.Precision.HIGHEST) / jnp.float32(temperature)
    logits = logits - jnp.max(logits, axis=1, keepdims=True)
    n = cf.shape[0]
    logits_mask = 1.0 - jnp.eye(n, dtype=jnp.float32)
    mask = (labels[:, None] == labels[None, :]).astype(jnp.float32) * logits_mask
    exp_logits = jnp.exp(logits) * logits_mask
    log_prob = logits - jnp.log(jnp.sum(exp_logits, axis=1, keepdims=True))
    mlpp = jnp.sum(mask * log_prob, axis=1) / jnp.sum(mask, axis=1)
    return jnp.mean(-mlpp)


if __name__ == "__main__":
    key = jax.random.PRNGKey(0)
    k1, k2, k3 = jax.random.split(key, 3)
    temperature = 0.07
    n_views = 2

    def _check(kout, ref):
        assert bool(jnp.isfinite(kout)) and bool(jnp.isfinite(ref)), (kout, ref)
        # bf16 MXU denominator vs fp32 torch-mirror reference.
        assert jnp.allclose(kout, ref, rtol=2e-2, atol=2e-2), (kout, ref)

    # --- 1. small single-tile case, default block heuristic ------------------
    bsz, d = 8, 32
    feats = jax.random.normal(k1, (bsz, n_views, d), dtype=jnp.float32)
    feats = feats / jnp.linalg.norm(feats, axis=-1, keepdims=True)
    label1 = jnp.array([0, 1, 2, 3, 0, 1, 2, 3], dtype=jnp.int32)
    label2 = jnp.array([0, 1, 2, 3, 3, 2, 1, 0], dtype=jnp.int32)
    out = jax.block_until_ready(supcon_loss_inter(temperature, feats, label1, label2))
    _check(out, _reference_loss(temperature, feats, label1, label2))

    # --- 2. multi-tile: exercises the mask-free fast path, the gated diag and
    #        column-padding paths, and the online accumulation (N=192) --------
    bsz2, d2 = 96, 32
    feats2 = jax.random.normal(k2, (bsz2, n_views, d2), dtype=jnp.float32)
    feats2 = feats2 / jnp.linalg.norm(feats2, axis=-1, keepdims=True)
    lab2 = jnp.arange(bsz2, dtype=jnp.int32) % 12
    out2 = jax.block_until_ready(
        supcon_loss_inter(temperature, feats2, lab2, lab2,
                          block_rows=64, block_cols=128))
    _check(out2, _reference_loss(temperature, feats2, lab2, lab2))

    # --- 3. no-column-padding case with the default D/N/VMEM-aware blocks ----
    bsz3, d3 = 128, 32                      # N = 256, exact multiple of tc
    feats3 = jax.random.normal(k3, (bsz3, n_views, d3), dtype=jnp.float32)
    feats3 = feats3 / jnp.linalg.norm(feats3, axis=-1, keepdims=True)
    lab3 = jnp.arange(bsz3, dtype=jnp.int32) % 16
    out3 = jax.block_until_ready(supcon_loss_inter(temperature, feats3, lab3, lab3))
    _check(out3, _reference_loss(temperature, feats3, lab3, lab3))

    print("KERNEL_OK")
</pallas_src>

<mosaic_0001>
module attributes {stable_mosaic.version = 11 : i64} {
  func.func @_supcon_inter_kernel(%arg0: i32, %arg1: i32, %arg2: memref<16x1xf32, #tpu.memory_space<vmem>>, %arg3: memref<16x1xf32, #tpu.memory_space<vmem>>, %arg4: memref<16x128xbf16, #tpu.memory_space<vmem>>, %arg5: memref<128x128xbf16, #tpu.memory_space<vmem>>, %arg6: memref<16x1xf32, #tpu.memory_space<vmem>>, %arg7: memref<16x1xf32, #tpu.memory_space<vmem>>, %arg8: memref<16x1xf32, #tpu.memory_space<vmem>>) attributes {dimension_semantics = [#tpu.dimension_semantics<parallel>, #tpu.dimension_semantics<arbitrary>], iteration_bounds = array<i64: 1, 1>, scalar_prefetch = 0 : i64, scratch_operands = 2 : i64, tpu.core_type = #tpu.core_type<tc>, window_params = [{transform_indices = @transform_0, window_bounds = array<i64: 16, 1>}, {transform_indices = @transform_1, window_bounds = array<i64: 16, 1>}, {transform_indices = @transform_2, window_bounds = array<i64: 16, 128>}, {transform_indices = @transform_3, window_bounds = array<i64: 128, 128>}, {transform_indices = @transform_4, window_bounds = array<i64: 16, 1>}]} {
    %c0_i32 = arith.constant 0 : i32
    %0 = arith.cmpi eq, %arg1, %c0_i32 : i32
    %1 = arith.extui %0 : i1 to i32
    %c0_i32_0 = arith.constant 0 : i32
    %2 = arith.cmpi ne, %1, %c0_i32_0 : i32
    scf.if %2 {
      %cst_11 = arith.constant 0xFF800000 : f32
      %23 = vector.broadcast %cst_11 : f32 to vector<16x1xf32>
      %c0_12 = arith.constant 0 : index
      %c0_13 = arith.constant 0 : index
      %24 = vector.load %arg7[%c0_12, %c0_13] : memref<16x1xf32, #tpu.memory_space<vmem>>, vector<16x1xf32>
      tpu.vector_store %arg7[%c0_12, %c0_13], %23 {strides = array<i32>} : memref<16x1xf32, #tpu.memory_space<vmem>>, vector<16x1xf32>,
      %cst_14 = arith.constant 0.000000e+00 : f32
      %25 = vector.broadcast %cst_14 : f32 to vector<16x1xf32>
      %c0_15 = arith.constant 0 : index
      %c0_16 = arith.constant 0 : index
      %26 = vector.load %arg8[%c0_15, %c0_16] : memref<16x1xf32, #tpu.memory_space<vmem>>, vector<16x1xf32>
      tpu.vector_store %arg8[%c0_15, %c0_16], %25 {strides = array<i32>} : memref<16x1xf32, #tpu.memory_space<vmem>>, vector<16x1xf32>,
    } else {
    }
    %c0 = arith.constant 0 : index
    %c0_1 = arith.constant 0 : index
    %3 = vector.load %arg4[%c0, %c0_1] : memref<16x128xbf16, #tpu.memory_space<vmem>>, vector<16x128xbf16>
    %c0_2 = arith.constant 0 : index
    %c0_3 = arith.constant 0 : index
    %4 = vector.load %arg5[%c0_2, %c0_3] : memref<128x128xbf16, #tpu.memory_space<vmem>>, vector<128x128xbf16>
    %cst = arith.constant dense<0.000000e+00> : vector<16x128xf32>
    %5 = tpu.matmul %3, %4, %cst {dimension_numbers = #tpu.dot_dimension_numbers<[1], [0], [0], [1], [0, 0, 1, 1], [], []>} : vector<16x128xbf16>, vector<128x128xbf16>, vector<16x128xf32> -> vector<16x128xf32>
    %c16_i32 = arith.constant 16 : i32
    %6 = arith.muli %arg0, %c16_i32 : i32
    %c128_i32 = arith.constant 128 : i32
    %7 = arith.muli %arg1, %c128_i32 : i32
    %c16_i32_4 = arith.constant 16 : i32
    %8 = arith.addi %6, %c16_i32_4 : i32
    %9 = arith.cmpi slt, %7, %8 : i32
    %c128_i32_5 = arith.constant 128 : i32
    %10 = arith.addi %7, %c128_i32_5 : i32
    %11 = arith.cmpi slt, %6, %10 : i32
    %12 = arith.andi %9, %11 : i1
    %c0_i32_6 = arith.constant 0 : i32
    %13 = arith.cmpi eq, %arg1, %c0_i32_6 : i32
    %14 = arith.ori %12, %13 : i1
    %15 = arith.extui %14 : i1 to i32
    %c0_i32_7 = arith.constant 0 : i32
    %16 = arith.cmpi ne, %15, %c0_i32_7 : i32
    scf.if %16 {
      %23 = tpu.iota {dimensions = array<i32: 0>} : vector<16x1xi32>
      %24 = vector.broadcast %6 : i32 to vector<16x1xi32>
      %25 = arith.addi %24, %23 : vector<16x1xi32>
      %26 = tpu.iota {dimensions = array<i32: 1>} : vector<1x128xi32>
      %27 = vector.broadcast %7 : i32 to vector<1x128xi32>
      %28 = arith.addi %27, %26 : vector<1x128xi32>
      %29 = vector.broadcast %25 : vector<16x1xi32> to vector<16x128xi32>
      %30 = vector.broadcast %28 : vector<1x128xi32> to vector<16x128xi32>
      %31 = arith.cmpi eq, %29, %30 : vector<16x128xi32>
      %c16_i32_11 = arith.constant 16 : i32
      %32 = vector.broadcast %c16_i32_11 : i32 to vector<1x128xi32>
      %33 = arith.cmpi sge, %28, %32 : vector<1x128xi32>
      %34 = vector.broadcast %33 : vector<1x128xi1> to vector<16x128xi1>
      %35 = arith.ori %31, %34 : vector<16x128xi1>
      %cst_12 = arith.constant 0xFF800000 : f32
      %36 = vector.broadcast %cst_12 : f32 to vector<16x128xf32>
      %37 = arith.select %35, %36, %5 : vector<16x128xi1>, vector<16x128xf32>
      %c0_13 = arith.constant 0 : index
      %c0_14 = arith.constant 0 : index
      %38 = vector.load %arg7[%c0_13, %c0_14] : memref<16x1xf32, #tpu.memory_space<vmem>>, vector<16x1xf32>
      %cst_15 = arith.constant dense<0xFF800000> : vector<16xf32>
      %39 = vector.multi_reduction <maximumf>, %37, %cst_15 [1] : vector<16x128xf32> to vector<16xf32>
      %40 = vector.shape_cast %39 : vector<16xf32> to vector<16x1xf32>
      %41 = arith.maximumf %38, %40 : vector<16x1xf32>
      %42 = arith.subf %38, %41 : vector<16x1xf32>
      %43 = math.exp %42 : vector<16x1xf32>
      %44 = vector.broadcast %41 : vector<16x1xf32> to vector<16x128xf32>
      %45 = arith.subf %37, %44 : vector<16x128xf32>
      %46 = math.exp %45 : vector<16x128xf32>
      %c0_16 = arith.constant 0 : index
      %c0_17 = arith.constant 0 : index
      %47 = vector.load %arg8[%c0_16, %c0_17] : memref<16x1xf32, #tpu.memory_space<vmem>>, vector<16x1xf32>
      %48 = arith.mulf %43, %47 : vector<16x1xf32>
      %cst_18 = arith.constant dense<0.000000e+00> : vector<16xf32>
      %49 = vector.multi_reduction <add>, %46, %cst_18 [1] : vector<16x128xf32> to vector<16xf32>
      %50 = vector.shape_cast %49 : vector<16xf32> to vector<16x1xf32>
      %51 = arith.addf %48, %50 : vector<16x1xf32>
      %c0_19 = arith.constant 0 : index
      %c0_20 = arith.constant 0 : index
      %52 = vector.load %arg8[%c0_19, %c0_20] : memref<16x1xf32, #tpu.memory_space<vmem>>, vector<16x1xf32>
      tpu.vector_store %arg8[%c0_19, %c0_20], %51 {strides = array<i32>} : memref<16x1xf32, #tpu.memory_space<vmem>>, vector<16x1xf32>,
      %c0_21 = arith.constant 0 : index
      %c0_22 = arith.constant 0 : index
      %53 = vector.load %arg7[%c0_21, %c0_22] : memref<16x1xf32, #tpu.memory_space<vmem>>, vector<16x1xf32>
      tpu.vector_store %arg7[%c0_21, %c0_22], %41 {strides = array<i32>} : memref<16x1xf32, #tpu.memory_space<vmem>>, vector<16x1xf32>,
    } else {
    }
    %true = arith.constant true
    %17 = arith.xori %14, %true : i1
    %18 = arith.extui %17 : i1 to i32
    %c0_i32_8 = arith.constant 0 : i32
    %19 = arith.cmpi ne, %18, %c0_i32_8 : i32
    scf.if %19 {
      %c0_11 = arith.constant 0 : index
      %c0_12 = arith.constant 0 : index
      %23 = vector.load %arg7[%c0_11, %c0_12] : memref<16x1xf32, #tpu.memory_space<vmem>>, vector<16x1xf32>
      %cst_13 = arith.constant dense<0xFF800000> : vector<16xf32>
      %24 = vector.multi_reduction <maximumf>, %5, %cst_13 [1] : vector<16x128xf32> to vector<16xf32>
      %25 = vector.shape_cast %24 : vector<16xf32> to vector<16x1xf32>
      %26 = arith.maximumf %23, %25 : vector<16x1xf32>
      %27 = arith.subf %23, %26 : vector<16x1xf32>
      %28 = math.exp %27 : vector<16x1xf32>
      %29 = vector.broadcast %26 : vector<16x1xf32> to vector<16x128xf32>
      %30 = arith.subf %5, %29 : vector<16x128xf32>
      %31 = math.exp %30 : vector<16x128xf32>
      %c0_14 = arith.constant 0 : index
      %c0_15 = arith.constant 0 : index
      %32 = vector.load %arg8[%c0_14, %c0_15] : memref<16x1xf32, #tpu.memory_space<vmem>>, vector<16x1xf32>
      %33 = arith.mulf %28, %32 : vector<16x1xf32>
      %cst_16 = arith.constant dense<0.000000e+00> : vector<16xf32>
      %34 = vector.multi_reduction <add>, %31, %cst_16 [1] : vector<16x128xf32> to vector<16xf32>
      %35 = vector.shape_cast %34 : vector<16xf32> to vector<16x1xf32>
      %36 = arith.addf %33, %35 : vector<16x1xf32>
      %c0_17 = arith.constant 0 : index
      %c0_18 = arith.constant 0 : index
      %37 = vector.load %arg8[%c0_17, %c0_18] : memref<16x1xf32, #tpu.memory_space<vmem>>, vector<16x1xf32>
      tpu.vector_store %arg8[%c0_17, %c0_18], %36 {strides = array<i32>} : memref<16x1xf32, #tpu.memory_space<vmem>>, vector<16x1xf32>,
      %c0_19 = arith.constant 0 : index
      %c0_20 = arith.constant 0 : index
      %38 = vector.load %arg7[%c0_19, %c0_20] : memref<16x1xf32, #tpu.memory_space<vmem>>, vector<16x1xf32>
      tpu.vector_store %arg7[%c0_19, %c0_20], %26 {strides = array<i32>} : memref<16x1xf32, #tpu.memory_space<vmem>>, vector<16x1xf32>,
    } else {
    }
    %c0_i32_9 = arith.constant 0 : i32
    %20 = arith.cmpi eq, %arg1, %c0_i32_9 : i32
    %21 = arith.extui %20 : i1 to i32
    %c0_i32_10 = arith.constant 0 : i32
    %22 = arith.cmpi ne, %21, %c0_i32_10 : i32
    scf.if %22 {
      %c0_11 = arith.constant 0 : index
      %c0_12 = arith.constant 0 : index
      %23 = vector.load %arg3[%c0_11, %c0_12] : memref<16x1xf32, #tpu.memory_space<vmem>>, vector<16x1xf32>
      %c0_13 = arith.constant 0 : index
      %c0_14 = arith.constant 0 : index
      %24 = vector.load %arg7[%c0_13, %c0_14] : memref<16x1xf32, #tpu.memory_space<vmem>>, vector<16x1xf32>
      %c0_15 = arith.constant 0 : index
      %c0_16 = arith.constant 0 : index
      %25 = vector.load %arg8[%c0_15, %c0_16] : memref<16x1xf32, #tpu.memory_space<vmem>>, vector<16x1xf32>
      %26 = math.log %25 : vector<16x1xf32>
      %27 = arith.addf %24, %26 : vector<16x1xf32>
      %c0_17 = arith.constant 0 : index
      %c0_18 = arith.constant 0 : index
      %28 = vector.load %arg2[%c0_17, %c0_18] : memref<16x1xf32, #tpu.memory_space<vmem>>, vector<16x1xf32>
      %29 = arith.mulf %23, %27 : vector<16x1xf32>
      %30 = arith.subf %28, %29 : vector<16x1xf32>
      %cst_19 = arith.constant 1.000000e+00 : f32
      %31 = vector.broadcast %cst_19 : f32 to vector<16x1xf32>
      %32 = arith.maximumf %23, %31 : vector<16x1xf32>
      %33 = arith.divf %30, %32 : vector<16x1xf32>
      %34 = tpu.iota {dimensions = array<i32: 0>} : vector<16x1xi32>
      %35 = vector.broadcast %6 : i32 to vector<16x1xi32>
      %36 = arith.addi %35, %34 : vector<16x1xi32>
      %c16_i32_20 = arith.constant 16 : i32
      %37 = vector.broadcast %c16_i32_20 : i32 to vector<16x1xi32>
      %38 = arith.cmpi slt, %36, %37 : vector<16x1xi32>
      %cst_21 = arith.constant 0.000000e+00 : f32
      %39 = vector.broadcast %cst_21 : f32 to vector<16x1xf32>
      %40 = arith.cmpf ogt, %23, %39 : vector<16x1xf32>
      %41 = arith.andi %38, %40 : vector<16x1xi1>
      %cst_22 = arith.constant 0.000000e+00 : f32
      %42 = vector.broadcast %cst_22 : f32 to vector<16x1xf32>
      %43 = arith.subf %42, %33 : vector<16x1xf32>
      %cst_23 = arith.constant 0.000000e+00 : f32
      %44 = vector.broadcast %cst_23 : f32 to vector<16x1xf32>
      %45 = arith.select %41, %43, %44 : vector<16x1xi1>, vector<16x1xf32>
      %c0_24 = arith.constant 0 : index
      %c0_25 = arith.constant 0 : index
      %46 = vector.load %arg6[%c0_24, %c0_25] : memref<16x1xf32, #tpu.memory_space<vmem>>, vector<16x1xf32>
      tpu.vector_store %arg6[%c0_24, %c0_25], %45 {strides = array<i32>} : memref<16x1xf32, #tpu.memory_space<vmem>>, vector<16x1xf32>,
    } else {
    }
    return
  }
  func.func @transform_0(%arg0: i32, %arg1: i32) -> (i32, i32) {
    %c0_i32 = arith.constant 0 : i32
    %c0_i32_0 = arith.constant 0 : i32
    return %arg0, %c0_i32 : i32, i32
  }
  func.func @transform_1(%arg0: i32, %arg1: i32) -> (i32, i32) {
    %c0_i32 = arith.constant 0 : i32
    %c0_i32_0 = arith.constant 0 : i32
    return %arg0, %c0_i32 : i32, i32
  }
  func.func @transform_2(%arg0: i32, %arg1: i32) -> (i32, i32) {
    %c0_i32 = arith.constant 0 : i32
    %c0_i32_0 = arith.constant 0 : i32
    return %arg0, %c0_i32 : i32, i32
  }
  func.func @transform_3(%arg0: i32, %arg1: i32) -> (i32, i32) {
    %c0_i32 = arith.constant 0 : i32
    %c0_i32_0 = arith.constant 0 : i32
    return %c0_i32, %arg1 : i32, i32
  }
  func.func @transform_4(%arg0: i32, %arg1: i32) -> (i32, i32) {
    %c0_i32 = arith.constant 0 : i32
    %c0_i32_0 = arith.constant 0 : i32
    return %arg0, %c0_i32 : i32, i32
  }
}

</mosaic_0001>

<llo_original>
// kernel: tpu_custom_call.1
$region0: #{tpu_custom_call.1}
  #allocation0 [shape = 'u32[]', space=smem, size = 0x4, offset = 0x4, fixed_abs, tag = 'smem constant byte address 0x4 - core index']
  #allocation1 [shape = 'u32[144,128]{1,0:T(1,128)}', space=vmem, size = 0x12000, scoped, tag = 'internal scratch']
  #allocation2 [shape = 'f32[16,1]{1,0:T(8,128)}', space=vmem, size = 0x2000, scoped, tag = 'scratch operand']
  #allocation3 [shape = 'f32[16,1]{1,0:T(8,128)}', space=vmem, size = 0x2000, scoped, tag = 'scratch operand']
  %s0 = inlined_call_operand.vmem [shape: f32[16,1], index: 0, kind: input, shape index: {}]
  %s1 = inlined_call_operand.vmem [shape: f32[16,1], index: 1, kind: input, shape index: {}]
  %s2 = inlined_call_operand.vmem [shape: bf16[16,128], index: 2, kind: input, shape index: {}]
  %s3 = inlined_call_operand.hbm [shape: bf16[128,128], index: 3, kind: input, shape index: {}]
  %s4 = inlined_call_operand.vmem [shape: f32[16,1], index: 4, kind: output, shape index: {}]
  %s5 = sld [smem:[#allocation0]]
  $region46: #{tpu_custom_call.1} parent=0
    _
  %s7 = ssub.s32 1, %s5
  %s8 = scalar_select 0, %s7, %s5
  $region1: #{tpu_custom_call.1} parent=0
    #allocation4 [shape = 'u8[32768]{0}', space=vmem, size = 0x8000, scoped, tag = 'input window, operand 3, single buffered']
    #allocation5 [shape = 's32[1]{0}', space=sflag, size = 0x4, scoped, tag = 'scoped memory for tpu_custom_call.1']
    %9 = vsyncpa [#allocation5], 0
    // Predicated region
    $region2: #{tpu_custom_call.1} parent=1 // pred_check
      _
    $region3: #{tpu_custom_call.1} parent=1 // pred_check_branch
      %11 = sbr.rel (0) target = $region5
    $region4: #{tpu_custom_call.1} parent=1 // pred_region
      _
    $region5: #{tpu_custom_call.1} parent=1 // pred_fallthru
      _
    // Predicated region
    $region6: #{tpu_custom_call.1} parent=1 // pred_check
      _
    $region7: #{tpu_custom_call.1} parent=1 // pred_check_branch
      %13 = sbr.rel (0) target = $region9
    $region8: #{tpu_custom_call.1} parent=1 // pred_region
      _
    $region9: #{tpu_custom_call.1} parent=1 // pred_fallthru
      _
    // Predicated region
    $region10: #{tpu_custom_call.1} parent=1 // pred_check
      _
    $region11: #{tpu_custom_call.1} parent=1 // pred_check_branch
      %15 = sbr.rel (0) target = $region13
    $region12: #{tpu_custom_call.1} parent=1 // pred_region
      _
    $region13: #{tpu_custom_call.1} parent=1 // pred_fallthru
      _
    // Predicated region
    $region14: #{tpu_custom_call.1} parent=1 // pred_check
      _
    $region15: #{tpu_custom_call.1} parent=1 // pred_check_branch
      %17 = sbr.rel (0) target = $region17
    $region16: #{tpu_custom_call.1} parent=1 // pred_region
      %s19 = ssub.s32 1024, 1024
      %20 = vsyncadd [#allocation5], %s19
      %s21 = sshll.u32 [#allocation4], 4
      %s22 = int_to_ptr.vmem [resolvable:$true] %s21
      %27 = dma.hbm_to_vmem [thread:$0]  %s3, 1024, %s22, [#allocation5], 64, 64, 4
    $region17: #{tpu_custom_call.1} parent=1 // pred_fallthru
      _
    // Predicated region
    $region18: #{tpu_custom_call.1} parent=1 // pred_check
      _
    $region19: #{tpu_custom_call.1} parent=1 // pred_check_branch
      %29 = sbr.rel (0) target = $region21
    $region20: #{tpu_custom_call.1} parent=1 // pred_region
      %30 = dma.done [#allocation5], 1024
    $region21: #{tpu_custom_call.1} parent=1 // pred_fallthru
      _
    %p32 = scmp.eq.s32.totalorder 0, 0
    // Predicated region
    $region22: #{tpu_custom_call.1} parent=1 // pred_check
      %p33 = pneg %p32
    $region23: #{tpu_custom_call.1} parent=1 // pred_check_branch
      %35 = sbr.rel (%p33) target = $region25
    $region24: #{tpu_custom_call.1} parent=1 // pred_region
      %vm36 = vcmask 7168
      %37 = vst.msk [vmem:[#allocation2] sm:$0xff] %vm36, -inf
      %38 = vst.msk [vmem:[#allocation2 + $0x8] sm:$0xff] %vm36, -inf
      %39 = vst.msk [vmem:[#allocation3] sm:$0xff] %vm36, 0.0
      %40 = vst.msk [vmem:[#allocation3 + $0x8] sm:$0xff] %vm36, 0.0
    $region25: #{tpu_custom_call.1} parent=1 // pred_fallthru
      _
    %v41 = vld [vmem:[%s2] sm:$0xf]
    %v42 = vld [vmem:[%s2 + $0x4] sm:$0xf]
    %v43 = vld [vmem:[#allocation4] sm:$0xf]
    %v44 = vld [vmem:[#allocation4 + $0x4] sm:$0xf]
    %v45 = vld [vmem:[#allocation4 + $0x8] sm:$0xf]
    %v46 = vld [vmem:[#allocation4 + $0xc] sm:$0xf]
    %v47 = vld [vmem:[#allocation4 + $0x10] sm:$0xf]
    %v48 = vld [vmem:[#allocation4 + $0x14] sm:$0xf]
    %v49 = vld [vmem:[#allocation4 + $0x18] sm:$0xf]
    %v50 = vld [vmem:[#allocation4 + $0x1c] sm:$0xf]
    %v51 = vld [vmem:[#allocation4 + $0x20] sm:$0xf]
    %v52 = vld [vmem:[#allocation4 + $0x24] sm:$0xf]
    %v53 = vld [vmem:[#allocation4 + $0x28] sm:$0xf]
    %v54 = vld [vmem:[#allocation4 + $0x2c] sm:$0xf]
    %v55 = vld [vmem:[#allocation4 + $0x30] sm:$0xf]
    %v56 = vld [vmem:[#allocation4 + $0x34] sm:$0xf]
    %v57 = vld [vmem:[#allocation4 + $0x38] sm:$0xf]
    %v58 = vld [vmem:[#allocation4 + $0x3c] sm:$0xf]
    %v61 = vunpack.c.l.b16 %v41
    %v62 = vunpack.c.l.b16 %v42
    %v63 = vpack.c.b16 %v62, %v61
    %v81 = vunpack.c.l.b16 %v43
    %v82 = vunpack.c.l.b16 %v44
    %v83 = vunpack.c.l.b16 %v45
    %v84 = vunpack.c.l.b16 %v46
    %v85 = vunpack.c.l.b16 %v47
    %v86 = vunpack.c.l.b16 %v48
    %v87 = vunpack.c.l.b16 %v49
    %v88 = vunpack.c.l.b16 %v50
    %v89 = vunpack.c.l.b16 %v51
    %v90 = vunpack.c.l.b16 %v52
    %v91 = vunpack.c.l.b16 %v53
    %v92 = vunpack.c.l.b16 %v54
    %v93 = vunpack.c.l.b16 %v55
    %v94 = vunpack.c.l.b16 %v56
    %v95 = vunpack.c.l.b16 %v57
    %v96 = vunpack.c.l.b16 %v58
    %v97 = vpack.c.b16 %v82, %v81
    %v98 = vpack.c.b16 %v84, %v83
    %v99 = vpack.c.b16 %v86, %v85
    %v100 = vpack.c.b16 %v88, %v87
    %v101 = vpack.c.b16 %v90, %v89
    %v102 = vpack.c.b16 %v92, %v91
    %v103 = vpack.c.b16 %v94, %v93
    %v104 = vpack.c.b16 %v96, %v95
    %113 = vmatprep.subr.bf16.mxu0 0
    %114 = vmatpush1.bf16.msra.mxu0 %v97
    %115 = vmatprep.subr.bf16.mxu0 0
    %116 = vmatpush1.bf16.msra.mxu0 %v98
    %117 = vmatprep.subr.bf16.mxu0 0
    %118 = vmatpush1.bf16.msra.mxu0 %v99
    %119 = vmatprep.subr.bf16.mxu0 0
    %120 = vmatpush1.bf16.msra.mxu0 %v100
    %121 = vmatprep.subr.bf16.mxu0 0
    %122 = vmatpush1.bf16.msra.mxu0 %v101
    %123 = vmatprep.subr.bf16.mxu0 0
    %124 = vmatpush1.bf16.msra.mxu0 %v102
    %125 = vmatprep.subr.bf16.mxu0 0
    %126 = vmatpush1.bf16.msra.mxu0 %v103
    %127 = vmatprep.subr.bf16.mxu0 0
    %128 = vmatpush1.bf16.msra.mxu0 %v104
    %129 = vmatprep.subr.bf16.mxu0 0
    %130 = vmatpush1.bf16.msra.mxu0 0
    %131 = vmatprep.subr.bf16.mxu0 0
    %132 = vmatpush1.bf16.msra.mxu0 0
    %133 = vmatprep.subr.bf16.mxu0 0
    %134 = vmatpush1.bf16.msra.mxu0 0
    %135 = vmatprep.subr.bf16.mxu0 0
    %136 = vmatpush1.bf16.msra.mxu0 0
    %137 = vmatprep.subr.bf16.mxu0 0
    %138 = vmatpush1.bf16.msra.mxu0 0
    %139 = vmatprep.subr.bf16.mxu0 0
    %140 = vmatpush1.bf16.msra.mxu0 0
    %141 = vmatprep.subr.bf16.mxu0 0
    %142 = vmatpush1.bf16.msra.mxu0 0
    %143 = vmatprep.subr.bf16.mxu0 0
    %144 = vmatpush1.bf16.msra.mxu0 0
    %145 = vmatprep.mubr.bf16.mxu0 0
    %146 = vmatmul.mubr.bf16.gmra.mrb[0].mxu0 %v63
    %v147 = vpop.f32.mrb[0].mxu0
    %v148 = vadd.f32 0.0, %v147
    %v149 = vpop.f32.mrb[0].mxu0
    %v150 = vpop.f32.mrb[0].mxu0
    %v151 = vadd.f32 0.0, %v150
    %v152 = vpop.f32.mrb[0].mxu0
    %153 = vdwg.mxu0
    %s154 = smul.u32 0, 16
    %s155 = smul.u32 0, 128
    %s156 = sadd.s32 %s154, 16
    %p157 = scmp.lt.s32.totalorder %s155, %s156
    %s158 = sadd.s32 %s155, 128
    %p159 = scmp.lt.s32.totalorder %s154, %s158
    %p160 = pnand %p157, %p159
    %p161 = pneg %p160
    %p162 = por %p161, %p32
    // Predicated region
    $region26: #{tpu_custom_call.1} parent=1 // pred_check
      %p163 = pneg %p162
    $region27: #{tpu_custom_call.1} parent=1 // pred_check_branch
      %165 = sbr.rel (%p163) target = $region29
    $region28: #{tpu_custom_call.1} parent=1 // pred_region
      %v166 = vlaneseq
      %v167 = vshrl.u32 %v166, 7
      %v168 = vadd.s32 %v167, 8
      %v169 = vstv %s154
      %v170 = vadd.s32 %v169, %v167
      %v171 = vadd.s32 %v169, %v168
      %v172 = vlaneseq
      %v173 = vand.u32 %v172, 127
      %v174 = vstv %s155
      %v175 = vadd.s32 %v174, %v173
      %vm176 = vcmp.eq.s32.totalorder %v170, %v175
      %vm177 = vcmp.eq.s32.totalorder %v171, %v175
      %vm178 = vcmp.ge.s32.totalorder %v175, 16
      %v179 = vsel %vm178, 1, 0
      %vm180 = vcmp.eq.s32.totalorder %v179, 1
      %vm181 = vmor %vm176, %vm180
      %vm182 = vmor %vm177, %vm180
      %v183 = vsel %vm181, -inf, %v148
      %v184 = vsel %vm182, -inf, %v151
      %v185 = vld [vmem:[#allocation2] sm:$0xff]
      %v186 = vld [vmem:[#allocation2 + $0x8] sm:$0xff]
      %187 = vmax.xlane.f32.xlu0 %v183
      %v188 = vpop.xlane.xlu0 %187
      %189 = vmax.xlane.f32.xlu0 %v184
      %v190 = vpop.xlane.xlu0 %189
      %v191 = vmax.f32 %v185, %v188
      %v192 = vmax.f32 %v186, %v190
      %v193 = vsub.f32 %v185, %v191
      %v194 = vsub.f32 %v186, %v192
      %v195 = vmul.f32 %v193, 1.442695
      %v196 = vpow.pop %v195
      %v197 = vmul.f32 %v194, 1.442695
      %v198 = vpow.pop %v197
      %200 = vset.pattern.permute.xlu0 0
      %201 = vperm.xlu0 %200, %v191
      %v202 = vpop.permute.xlu0 %201
      %205 = vset.pattern.permute.xlu0 0
      %206 = vperm.xlu0 %205, %v192
      %v207 = vpop.permute.xlu0 %206
      %v209 = vsub.f32 %v183, %v202
      %v210 = vsub.f32 %v184, %v207
      %v211 = vmul.f32 %v209, 1.442695
      %v212 = vpow.pop %v211
      %v213 = vmul.f32 %v210, 1.442695
      %v214 = vpow.pop %v213
      %v215 = vld [vmem:[#allocation3] sm:$0xff]
      %v216 = vld [vmem:[#allocation3 + $0x8] sm:$0xff]
      %v217 = vmul.f32 %v196, %v215
      %v218 = vmul.f32 %v198, %v216
      %219 = vadd.xlane.f32.xlu0 %v212
      %v220 = vpop.xlane.xlu0 %219
      %221 = vadd.xlane.f32.xlu0 %v214
      %v222 = vpop.xlane.xlu0 %221
      %v223 = vadd.f32 %v217, %v220
      %v224 = vadd.f32 %v218, %v222
      %vm225 = vcmask 7168
      %226 = vst.msk [vmem:[#allocation3] sm:$0xff] %vm225, %v223
      %227 = vst.msk [vmem:[#allocation3 + $0x8] sm:$0xff] %vm225, %v224
      %228 = vst.msk [vmem:[#allocation2] sm:$0xff] %vm225, %v191
      %229 = vst.msk [vmem:[#allocation2 + $0x8] sm:$0xff] %vm225, %v192
    $region29: #{tpu_custom_call.1} parent=1 // pred_fallthru
      _
    %p230 = pneg %p162
    // Predicated region
    $region30: #{tpu_custom_call.1} parent=1 // pred_check
      _
    $region31: #{tpu_custom_call.1} parent=1 // pred_check_branch
      %232 = sbr.rel (%p162) target = $region33
    $region32: #{tpu_custom_call.1} parent=1 // pred_region
      %v233 = vld [vmem:[#allocation2] sm:$0xff]
      %v234 = vld [vmem:[#allocation2 + $0x8] sm:$0xff]
      %235 = vmax.xlane.f32.xlu0 %v148
      %v236 = vpop.xlane.xlu0 %235
      %237 = vmax.xlane.f32.xlu0 %v151
      %v238 = vpop.xlane.xlu0 %237
      %v239 = vmax.f32 %v233, %v236
      %v240 = vmax.f32 %v234, %v238
      %v241 = vsub.f32 %v233, %v239
      %v242 = vsub.f32 %v234, %v240
      %v243 = vmul.f32 %v241, 1.442695
      %v244 = vpow.pop %v243
      %v245 = vmul.f32 %v242, 1.442695
      %v246 = vpow.pop %v245
      %248 = vset.pattern.permute.xlu0 0
      %249 = vperm.xlu0 %248, %v239
      %v250 = vpop.permute.xlu0 %249
      %253 = vset.pattern.permute.xlu0 0
      %254 = vperm.xlu0 %253, %v240
      %v255 = vpop.permute.xlu0 %254
      %v257 = vsub.f32 %v148, %v250
      %v258 = vsub.f32 %v151, %v255
      %v259 = vmul.f32 %v257, 1.442695
      %v260 = vpow.pop %v259
      %v261 = vmul.f32 %v258, 1.442695
      %v262 = vpow.pop %v261
      %v263 = vld [vmem:[#allocation3] sm:$0xff]
      %v264 = vld [vmem:[#allocation3 + $0x8] sm:$0xff]
      %v265 = vmul.f32 %v244, %v263
      %v266 = vmul.f32 %v246, %v264
      %267 = vadd.xlane.f32.xlu0 %v260
      %v268 = vpop.xlane.xlu0 %267
      %269 = vadd.xlane.f32.xlu0 %v262
      %v270 = vpop.xlane.xlu0 %269
      %v271 = vadd.f32 %v265, %v268
      %v272 = vadd.f32 %v266, %v270
      %vm273 = vcmask 7168
      %274 = vst.msk [vmem:[#allocation3] sm:$0xff] %vm273, %v271
      %275 = vst.msk [vmem:[#allocation3 + $0x8] sm:$0xff] %vm273, %v272
      %276 = vst.msk [vmem:[#allocation2] sm:$0xff] %vm273, %v239
      %277 = vst.msk [vmem:[#allocation2 + $0x8] sm:$0xff] %vm273, %v240
    $region33: #{tpu_custom_call.1} parent=1 // pred_fallthru
      _
    // Predicated region
    $region34: #{tpu_custom_call.1} parent=1 // pred_check
      %p278 = pneg %p32
    $region35: #{tpu_custom_call.1} parent=1 // pred_check_branch
      %280 = sbr.rel (%p278) target = $region37
    $region36: #{tpu_custom_call.1} parent=1 // pred_region
      %v281 = vld [vmem:[%s1] sm:$0xff]
      %v282 = vld [vmem:[%s1 + $0x8] sm:$0xff]
      %v283 = vld [vmem:[#allocation2] sm:$0xff]
      %v284 = vld [vmem:[#allocation2 + $0x8] sm:$0xff]
      %v285 = vld [vmem:[#allocation3] sm:$0xff]
      %v286 = vld [vmem:[#allocation3 + $0x8] sm:$0xff]
      %v287 = vlog2.pop %v285
      %v288 = vmul.f32 %v287, 0.6931472
      %v289 = vlog2.pop %v286
      %v290 = vmul.f32 %v289, 0.6931472
      %v291 = vadd.f32 %v283, %v288
      %v292 = vadd.f32 %v284, %v290
      %v293 = vld [vmem:[%s0] sm:$0xff]
      %v294 = vld [vmem:[%s0 + $0x8] sm:$0xff]
      %v295 = vmul.f32 %v281, %v291
      %v296 = vmul.f32 %v282, %v292
      %v297 = vsub.f32 %v293, %v295
      %v298 = vsub.f32 %v294, %v296
      %v299 = vmax.f32 %v281, 1.0
      %v300 = vmax.f32 %v282, 1.0
      %v301 = vrcp.pop %v299
      %v302 = vmul.f32 %v297, %v301
      %v303 = vrcp.pop %v300
      %v304 = vmul.f32 %v298, %v303
      %v305 = vlaneseq
      %v306 = vshrl.u32 %v305, 7
      %v307 = vadd.s32 %v306, 8
      %v308 = vstv %s154
      %v309 = vadd.s32 %v308, %v306
      %v310 = vadd.s32 %v308, %v307
      %vm311 = vcmp.lt.s32.totalorder %v309, 16
      %vm312 = vcmp.lt.s32.totalorder %v310, 16
      %vm313 = vcmp.gt.f32.partialorder %v281, 0.0
      %vm314 = vcmp.gt.f32.partialorder %v282, 0.0
      %vm315 = vmand %vm311, %vm313
      %vm316 = vmand %vm312, %vm314
      %v317 = vsub.f32 0.0, %v302
      %v318 = vsub.f32 0.0, %v304
      %v319 = vsel %vm315, %v317, 0.0
      %v320 = vsel %vm316, %v318, 0.0
      %vm321 = vcmask 7168
      %322 = vst.msk [vmem:[%s4] sm:$0xff] %vm321, %v319
      %323 = vst.msk [vmem:[%s4 + $0x8] sm:$0xff] %vm321, %v320
    $region37: #{tpu_custom_call.1} parent=1 // pred_fallthru
      _
    // Predicated region
    $region38: #{tpu_custom_call.1} parent=1 // pred_check
      _
    $region39: #{tpu_custom_call.1} parent=1 // pred_check_branch
      %325 = sbr.rel (0) target = $region41
    $region40: #{tpu_custom_call.1} parent=1 // pred_region
      _
    $region41: #{tpu_custom_call.1} parent=1 // pred_fallthru
      _
    // Predicated region
    $region42: #{tpu_custom_call.1} parent=1 // pred_check
      _
    $region43: #{tpu_custom_call.1} parent=1 // pred_check_branch
      %327 = sbr.rel (0) target = $region45
    $region44: #{tpu_custom_call.1} parent=1 // pred_region
      _
    $region45: #{tpu_custom_call.1} parent=1 // pred_fallthru
      _
    %328 = vsyncpa [#allocation5], 1

</llo_original>
